<compile_context>
chip_gen: v5e
topology: v5e:2x2
jax: 0.10.0
libtpu: 0.0.40
codegen_flags: <defaults>
</compile_context>

<pallas_src>
import functools

import numpy as np
import jax
import jax.numpy as jnp
from jax.experimental import pallas as pl
from jax.experimental.pallas import tpu as pltpu


# ----------------------------------------------------------------------------
# Pallas kernel: one (batch, len1-tile) grid point
# ----------------------------------------------------------------------------
def _seq_attn_kernel(*refs, identity, need_attention):
    refs = list(refs)
    x_ref = refs.pop(0)            # (1, TL1, H)
    y_ref = refs.pop(0)            # (1, L2, H)
    if identity:
        w_ref = b_ref = None
    else:
        w_ref = refs.pop(0)        # (H, H)   (already transposed: x @ w + b)
        b_ref = refs.pop(0)        # (1, H)
    m_ref = refs.pop(0)            # (1, 1, L2) additive mask bias (0 / -1e30)
    out_ref = refs.pop(0)          # (1, TL1, H)
    alpha_ref = refs.pop(0) if need_attention else None   # (1, TL1, L2)
    yp_s = refs.pop(0)             # VMEM scratch (L2, H): projected y

    # y projection: computed once per batch (first len1 tile), reused after.
    @pl.when(pl.program_id(1) == 0)
    def _():
        y = y_ref[0]
        if identity:
            yp_s[...] = y
        else:
            yp_s[...] = jnp.maximum(
                jnp.dot(y, w_ref[...], preferred_element_type=jnp.float32)
                + b_ref[...], 0.0)

    x = x_ref[0]                                              # (TL1, H)
    if identity:
        xp = x
    else:
        xp = jnp.maximum(
            jnp.dot(x, w_ref[...], preferred_element_type=jnp.float32)
            + b_ref[...], 0.0)

    # scores = xp @ yp^T   -- contract hidden dims directly (no transpose copy)
    scores = jax.lax.dot_general(
        xp, yp_s[...], (((1,), (1,)), ((), ())),
        preferred_element_type=jnp.float32)                   # (TL1, L2)
    scores = scores + m_ref[0]                                # broadcast (1, L2)

    # softmax over len2 (EUP exp + XLU reduce + EUP reciprocal)
    smax = jnp.max(scores, axis=-1, keepdims=True)
    p = jnp.exp(scores - smax)
    denom = jnp.sum(p, axis=-1, keepdims=True)
    alpha = p * pl.reciprocal(denom, approx=False)            # (TL1, L2)

    out = jnp.dot(alpha, y_ref[0], preferred_element_type=jnp.float32)
    out_ref[0] = out.astype(out_ref.dtype)
    if need_attention:
        alpha_ref[0] = alpha.astype(alpha_ref.dtype)


# ----------------------------------------------------------------------------
# Wrapper: matches SeqAttnMatchOptMaskSpSoftmax.forward
# ----------------------------------------------------------------------------
def seq_attn_match_sp_softmax(x, y, w=None, b=None, y_mask=None,
                              need_attention=False, *, block_l1=None):
    """x: (B, L1, H); y: (B, L2, H); w: (H, H) pre-transposed so proj = v @ w + b;
    y_mask: (B, L2) nonzero = masked (padding). Returns matched_seq (B, L1, H)
    and optionally alpha (B, L1, L2)."""
    B, L1, H = x.shape
    _, L2, _ = y.shape
    identity = w is None

    if block_l1 is None:
        block_l1 = L1
    assert L1 % block_l1 == 0, "block_l1 must divide len1"
    num_l1 = L1 // block_l1

    # Additive mask bias: 0 where valid, -1e30 where masked.
    if y_mask is None:
        mask_bias = jnp.zeros((B, 1, L2), jnp.float32)
    else:
        mask_bias = jnp.where(y_mask.astype(bool), jnp.float32(-1e30),
                              jnp.float32(0.0)).reshape(B, 1, L2)

    inputs = [x, y]
    in_specs = [
        pl.BlockSpec((1, block_l1, H), lambda bb, i: (bb, i, 0)),
        pl.BlockSpec((1, L2, H), lambda bb, i: (bb, 0, 0)),
    ]
    if not identity:
        inputs += [w, b.reshape(1, H).astype(jnp.float32)]
        in_specs += [
            pl.BlockSpec((H, H), lambda bb, i: (0, 0)),
            pl.BlockSpec((1, H), lambda bb, i: (0, 0)),
        ]
    inputs.append(mask_bias)
    in_specs.append(pl.BlockSpec((1, 1, L2), lambda bb, i: (bb, 0, 0)))

    out_shape = [jax.ShapeDtypeStruct((B, L1, H), x.dtype)]
    out_specs = [pl.BlockSpec((1, block_l1, H), lambda bb, i: (bb, i, 0))]
    if need_attention:
        out_shape.append(jax.ShapeDtypeStruct((B, L1, L2), jnp.float32))
        out_specs.append(pl.BlockSpec((1, block_l1, L2), lambda bb, i: (bb, i, 0)))

    kern = functools.partial(_seq_attn_kernel, identity=identity,
                             need_attention=need_attention)
    result = pl.pallas_call(
        kern,
        out_shape=tuple(out_shape) if need_attention else out_shape[0],
        grid=(B, num_l1),
        in_specs=in_specs,
        out_specs=tuple(out_specs) if need_attention else out_specs[0],
        scratch_shapes=[pltpu.VMEM((L2, H), jnp.float32)],
        compiler_params=pltpu.CompilerParams(
            dimension_semantics=("parallel", "arbitrary")),
    )(*inputs)
    return result


# ----------------------------------------------------------------------------
# Pure JAX reference (mirrors the PyTorch forward)
# ----------------------------------------------------------------------------
def _reference(x, y, w, b, y_mask, need_attention=False):
    hp = jax.lax.Precision.HIGHEST
    if w is not None:
        xp = jnp.maximum(jnp.einsum('blh,hk->blk', x, w, precision=hp) + b, 0.0)
        yp = jnp.maximum(jnp.einsum('blh,hk->blk', y, w, precision=hp) + b, 0.0)
    else:
        xp, yp = x, y
    scores = jnp.einsum('bik,bjk->bij', xp, yp, precision=hp)
    if y_mask is not None:
        scores = jnp.where(y_mask[:, None, :].astype(bool), -1e30, scores)
    alpha = jax.nn.softmax(scores, axis=-1)
    out = jnp.einsum('bij,bjh->bih', alpha, y, precision=hp)
    return (out, alpha) if need_attention else out


if __name__ == "__main__":
    # small shapes; H=128 keeps output/scores lane-dense
    B, L1, L2, H = 2, 16, 32, 128

    key = jax.random.PRNGKey(0)
    kx, ky, kw, kb = jax.random.split(key, 4)
    x = jax.random.normal(kx, (B, L1, H), jnp.float32)
    y = jax.random.normal(ky, (B, L2, H), jnp.float32)

    # torch nn.Linear(H, H): weight (out, in), forward = v @ W^T + b
    bound = 1.0 / (H ** 0.5)
    w_torch = jax.random.uniform(kw, (H, H), jnp.float32, -bound, bound)
    b_torch = jax.random.uniform(kb, (H,), jnp.float32, -bound, bound)
    w = w_torch.T      # glue: kernel computes v @ w + b

    # padding mask (nonzero = masked): last 5 positions of batch 1
    y_mask = jnp.zeros((B, L2), jnp.int32).at[1, L2 - 5:].set(1)

    # 1) default forward path: no mask, matched_seq only
    out = seq_attn_match_sp_softmax(x, y, w, b_torch, block_l1=8)
    out = jax.block_until_ready(out)
    assert out.shape == (B, L1, H), out.shape
    ref = _reference(x, y, w, b_torch, None)
    np.testing.assert_allclose(np.asarray(out), np.asarray(ref),
                               rtol=2e-3, atol=2e-3)

    # 2) masked path with attention weights returned
    out_m, alpha = seq_attn_match_sp_softmax(x, y, w, b_torch, y_mask=y_mask,
                                             need_attention=True, block_l1=8)
    jax.block_until_ready((out_m, alpha))
    ref_m, ref_alpha = _reference(x, y, w, b_torch, y_mask, need_attention=True)
    np.testing.assert_allclose(np.asarray(out_m), np.asarray(ref_m),
                               rtol=2e-3, atol=2e-3)
    np.testing.assert_allclose(np.asarray(alpha), np.asarray(ref_alpha),
                               rtol=2e-3, atol=2e-3)

    # TODO(synk): the torch source's `if y_mask:` / `.view(..., *y.size(1))`
    # lines are buggy as written; implemented the intended semantics
    # (mask padding positions with -inf, softmax over len2).
    print("KERNEL_OK")
</pallas_src>

<mosaic_0001>
module attributes {stable_mosaic.version = 11 : i64} {
  func.func @_seq_attn_kernel(%arg0: i32, %arg1: i32, %arg2: memref<1x8x128xf32, #tpu.memory_space<vmem>>, %arg3: memref<1x32x128xf32, #tpu.memory_space<vmem>>, %arg4: memref<128x128xf32, #tpu.memory_space<vmem>>, %arg5: memref<1x128xf32, #tpu.memory_space<vmem>>, %arg6: memref<1x1x32xf32, #tpu.memory_space<vmem>>, %arg7: memref<1x8x128xf32, #tpu.memory_space<vmem>>, %arg8: memref<32x128xf32, #tpu.memory_space<vmem>>) attributes {dimension_semantics = [#tpu.dimension_semantics<parallel>, #tpu.dimension_semantics<arbitrary>], iteration_bounds = array<i64: 2, 2>, scalar_prefetch = 0 : i64, scratch_operands = 1 : i64, tpu.core_type = #tpu.core_type<tc>, window_params = [{transform_indices = @transform_0, window_bounds = array<i64: 1, 8, 128>}, {transform_indices = @transform_1, window_bounds = array<i64: 1, 32, 128>}, {pipeline_mode = #tpu.pipeline_mode<synchronous>, transform_indices = @transform_2, window_bounds = array<i64: 128, 128>}, {pipeline_mode = #tpu.pipeline_mode<synchronous>, transform_indices = @transform_3, window_bounds = array<i64: 1, 128>}, {transform_indices = @transform_4, window_bounds = array<i64: 1, 1, 32>}, {transform_indices = @transform_5, window_bounds = array<i64: 1, 8, 128>}]} {
    %c0_i32 = arith.constant 0 : i32
    %0 = arith.cmpi eq, %arg1, %c0_i32 : i32
    %1 = arith.extui %0 : i1 to i32
    %c0_i32_0 = arith.constant 0 : i32
    %2 = arith.cmpi ne, %1, %c0_i32_0 : i32
    scf.if %2 {
      %c0_23 = arith.constant 0 : index
      %c0_24 = arith.constant 0 : index
      %c0_25 = arith.constant 0 : index
      %34 = vector.load %arg3[%c0_23, %c0_24, %c0_25] : memref<1x32x128xf32, #tpu.memory_space<vmem>>, vector<1x32x128xf32>
      %35 = vector.shape_cast %34 : vector<1x32x128xf32> to vector<32x128xf32>
      %c0_26 = arith.constant 0 : index
      %c0_27 = arith.constant 0 : index
      %36 = vector.load %arg4[%c0_26, %c0_27] : memref<128x128xf32, #tpu.memory_space<vmem>>, vector<128x128xf32>
      %cst_28 = arith.constant dense<0.000000e+00> : vector<32x128xf32>
      %37 = tpu.matmul %35, %36, %cst_28 {dimension_numbers = #tpu.dot_dimension_numbers<[1], [0], [0], [1], [0, 0, 1, 1], [], []>} : vector<32x128xf32>, vector<128x128xf32>, vector<32x128xf32> -> vector<32x128xf32>
      %c0_29 = arith.constant 0 : index
      %c0_30 = arith.constant 0 : index
      %38 = vector.load %arg5[%c0_29, %c0_30] : memref<1x128xf32, #tpu.memory_space<vmem>>, vector<1x128xf32>
      %39 = vector.broadcast %38 : vector<1x128xf32> to vector<32x128xf32>
      %40 = arith.addf %37, %39 : vector<32x128xf32>
      %cst_31 = arith.constant 0.000000e+00 : f32
      %41 = vector.broadcast %cst_31 : f32 to vector<32x128xf32>
      %42 = arith.maximumf %40, %41 : vector<32x128xf32>
      %c0_32 = arith.constant 0 : index
      %c0_33 = arith.constant 0 : index
      %43 = vector.load %arg8[%c0_32, %c0_33] : memref<32x128xf32, #tpu.memory_space<vmem>>, vector<32x128xf32>
      tpu.vector_store %arg8[%c0_32, %c0_33], %42 {strides = array<i32>} : memref<32x128xf32, #tpu.memory_space<vmem>>, vector<32x128xf32>,
    } else {
    }
    %c0 = arith.constant 0 : index
    %c0_1 = arith.constant 0 : index
    %c0_2 = arith.constant 0 : index
    %3 = vector.load %arg2[%c0, %c0_1, %c0_2] : memref<1x8x128xf32, #tpu.memory_space<vmem>>, vector<1x8x128xf32>
    %4 = vector.shape_cast %3 : vector<1x8x128xf32> to vector<8x128xf32>
    %c0_3 = arith.constant 0 : index
    %c0_4 = arith.constant 0 : index
    %5 = vector.load %arg4[%c0_3, %c0_4] : memref<128x128xf32, #tpu.memory_space<vmem>>, vector<128x128xf32>
    %cst = arith.constant dense<0.000000e+00> : vector<8x128xf32>
    %6 = tpu.matmul %4, %5, %cst {dimension_numbers = #tpu.dot_dimension_numbers<[1], [0], [0], [1], [0, 0, 1, 1], [], []>} : vector<8x128xf32>, vector<128x128xf32>, vector<8x128xf32> -> vector<8x128xf32>
    %c0_5 = arith.constant 0 : index
    %c0_6 = arith.constant 0 : index
    %7 = vector.load %arg5[%c0_5, %c0_6] : memref<1x128xf32, #tpu.memory_space<vmem>>, vector<1x128xf32>
    %8 = vector.broadcast %7 : vector<1x128xf32> to vector<8x128xf32>
    %9 = arith.addf %6, %8 : vector<8x128xf32>
    %cst_7 = arith.constant 0.000000e+00 : f32
    %10 = vector.broadcast %cst_7 : f32 to vector<8x128xf32>
    %11 = arith.maximumf %9, %10 : vector<8x128xf32>
    %c0_8 = arith.constant 0 : index
    %c0_9 = arith.constant 0 : index
    %12 = vector.load %arg8[%c0_8, %c0_9] : memref<32x128xf32, #tpu.memory_space<vmem>>, vector<32x128xf32>
    %cst_10 = arith.constant dense<0.000000e+00> : vector<8x32xf32>
    %13 = tpu.matmul %11, %12, %cst_10 {dimension_numbers = #tpu.dot_dimension_numbers<[1], [1], [0], [0], [0, 0, 1, 0], [], []>} : vector<8x128xf32>, vector<32x128xf32>, vector<8x32xf32> -> vector<8x32xf32>
    %c0_11 = arith.constant 0 : index
    %c0_12 = arith.constant 0 : index
    %c0_13 = arith.constant 0 : index
    %14 = vector.load %arg6[%c0_11, %c0_12, %c0_13] : memref<1x1x32xf32, #tpu.memory_space<vmem>>, vector<1x1x32xf32>
    %15 = vector.shape_cast %14 : vector<1x1x32xf32> to vector<1x32xf32>
    %16 = vector.broadcast %15 : vector<1x32xf32> to vector<8x32xf32>
    %17 = arith.addf %13, %16 : vector<8x32xf32>
    %cst_14 = arith.constant dense<0xFF800000> : vector<8xf32>
    %18 = vector.multi_reduction <maximumf>, %17, %cst_14 [1] : vector<8x32xf32> to vector<8xf32>
    %19 = vector.shape_cast %18 : vector<8xf32> to vector<8x1xf32>
    %20 = vector.broadcast %19 : vector<8x1xf32> to vector<8x32xf32>
    %21 = arith.subf %17, %20 : vector<8x32xf32>
    %22 = math.exp %21 : vector<8x32xf32>
    %cst_15 = arith.constant dense<0.000000e+00> : vector<8xf32>
    %23 = vector.multi_reduction <add>, %22, %cst_15 [1] : vector<8x32xf32> to vector<8xf32>
    %24 = vector.shape_cast %23 : vector<8xf32> to vector<8x1xf32>
    %25 = tpu.reciprocal %24 : vector<8x1xf32> -> vector<8x1xf32>
    %26 = vector.broadcast %25 : vector<8x1xf32> to vector<8x32xf32>
    %27 = arith.mulf %22, %26 : vector<8x32xf32>
    %c0_16 = arith.constant 0 : index
    %c0_17 = arith.constant 0 : index
    %c0_18 = arith.constant 0 : index
    %28 = vector.load %arg3[%c0_16, %c0_17, %c0_18] : memref<1x32x128xf32, #tpu.memory_space<vmem>>, vector<1x32x128xf32>
    %29 = vector.shape_cast %28 : vector<1x32x128xf32> to vector<32x128xf32>
    %cst_19 = arith.constant dense<0.000000e+00> : vector<8x128xf32>
    %30 = tpu.matmul %27, %29, %cst_19 {dimension_numbers = #tpu.dot_dimension_numbers<[1], [0], [0], [1], [0, 0, 1, 1], [], []>} : vector<8x32xf32>, vector<32x128xf32>, vector<8x128xf32> -> vector<8x128xf32>
    %c0_20 = arith.constant 0 : index
    %c0_21 = arith.constant 0 : index
    %c0_22 = arith.constant 0 : index
    %31 = vector.load %arg7[%c0_20, %c0_21, %c0_22] : memref<1x8x128xf32, #tpu.memory_space<vmem>>, vector<1x8x128xf32>
    %32 = vector.shape_cast %31 : vector<1x8x128xf32> to vector<8x128xf32>
    %33 = vector.shape_cast %30 : vector<8x128xf32> to vector<1x8x128xf32>
    tpu.vector_store %arg7[%c0_20, %c0_21, %c0_22], %33 {strides = array<i32>} : memref<1x8x128xf32, #tpu.memory_space<vmem>>, vector<1x8x128xf32>,
    return
  }
  func.func @transform_0(%arg0: i32, %arg1: i32) -> (i32, i32, i32) {
    %c0_i32 = arith.constant 0 : i32
    %c0_i32_0 = arith.constant 0 : i32
    return %arg0, %arg1, %c0_i32 : i32, i32, i32
  }
  func.func @transform_1(%arg0: i32, %arg1: i32) -> (i32, i32, i32) {
    %c0_i32 = arith.constant 0 : i32
    %c0_i32_0 = arith.constant 0 : i32
    %c0_i32_1 = arith.constant 0 : i32
    return %arg0, %c0_i32, %c0_i32_0 : i32, i32, i32
  }
  func.func @transform_2(%arg0: i32, %arg1: i32) -> (i32, i32) {
    %c0_i32 = arith.constant 0 : i32
    %c0_i32_0 = arith.constant 0 : i32
    %c0_i32_1 = arith.constant 0 : i32
    return %c0_i32, %c0_i32_0 : i32, i32
  }
  func.func @transform_3(%arg0: i32, %arg1: i32) -> (i32, i32) {
    %c0_i32 = arith.constant 0 : i32
    %c0_i32_0 = arith.constant 0 : i32
    %c0_i32_1 = arith.constant 0 : i32
    return %c0_i32, %c0_i32_0 : i32, i32
  }
  func.func @transform_4(%arg0: i32, %arg1: i32) -> (i32, i32, i32) {
    %c0_i32 = arith.constant 0 : i32
    %c0_i32_0 = arith.constant 0 : i32
    %c0_i32_1 = arith.constant 0 : i32
    return %arg0, %c0_i32, %c0_i32_0 : i32, i32, i32
  }
  func.func @transform_5(%arg0: i32, %arg1: i32) -> (i32, i32, i32) {
    %c0_i32 = arith.constant 0 : i32
    %c0_i32_0 = arith.constant 0 : i32
    return %arg0, %arg1, %c0_i32 : i32, i32, i32
  }
}

</mosaic_0001>

<llo_original>
// kernel: tpu_custom_call.1
$region0: #{tpu_custom_call.1}
  #allocation0 [shape = 'u32[]', space=smem, size = 0x4, offset = 0x4, fixed_abs, tag = 'smem constant byte address 0x4 - core index']
  #allocation1 [shape = 'u32[72,128]{1,0:T(1,128)}', space=vmem, size = 0x9000, scoped, tag = 'internal scratch']
  #allocation2 [shape = 'f32[32,128]{1,0:T(8,128)}', space=vmem, size = 0x4000, scoped, tag = 'scratch operand']
  %s0 = inlined_call_operand.hbm [shape: f32[2,16,128], index: 0, kind: input, shape index: {}]
  %s1 = inlined_call_operand.hbm [shape: f32[2,32,128], index: 1, kind: input, shape index: {}]
  %s2 = inlined_call_operand.hbm [shape: f32[128,128], index: 2, kind: input, shape index: {}]
  %s3 = inlined_call_operand.vmem [shape: f32[1,128], index: 3, kind: input, shape index: {}]
  %s4 = inlined_call_operand.vmem [shape: f32[2,1,32], index: 4, kind: input, shape index: {}]
  %s5 = inlined_call_operand.hbm [shape: f32[2,16,128], index: 5, kind: output, shape index: {}]
  %s6 = sld [smem:[#allocation0]]
  $region69: #{tpu_custom_call.1} parent=0
    _
  %s8 = ssub.s32 1, %s6
  %s9 = scalar_select 0, %s8, %s6
  $region1: #{tpu_custom_call.1} parent=0
    #allocation3 [shape = 'u8[8192]{0}', space=vmem, size = 0x2000, scoped, tag = 'input window, operand 0']
    #allocation4 [shape = 's32[2]{0}', space=sflag, size = 0x8, scoped, tag = 'scoped memory for tpu_custom_call.1']
    #allocation5 [shape = 's32[2]{0}', space=sflag, size = 0x8, scoped, tag = 'scoped memory for tpu_custom_call.1']
    #allocation6 [shape = 'u8[32768]{0}', space=vmem, size = 0x8000, scoped, tag = 'input window, operand 1']
    #allocation7 [shape = 's32[2]{0}', space=sflag, size = 0x8, scoped, tag = 'scoped memory for tpu_custom_call.1']
    #allocation8 [shape = 'u8[65536]{0}', space=vmem, size = 0x10000, scoped, tag = 'input window, operand 2, single buffered']
    #allocation9 [shape = 'u8[8192]{0}', space=vmem, size = 0x2000, scoped, tag = 'output window, operand 0']
    %10 = vsyncpa [#allocation4], 0
    %s11 = scalar_lea.sflag [#allocation4], 1
    %12 = vsyncpa %s11, 0
    %13 = vsyncpa [#allocation7], 0
    %s14 = scalar_lea.sflag [#allocation7], 1
    %15 = vsyncpa %s14, 0
    %16 = vsyncpa [#allocation5], 0
    %s17 = scalar_lea.sflag [#allocation5], 1
    %18 = vsyncpa %s17, 0
    loop: start=0, step=1, limit=6
    $region2: #{tpu_custom_call.1} parent=1 // loop_pre_header
      _
    $region3: #{tpu_custom_call.1} parent=1 // loop_header
      %s20 = sphi 0, %s24
      %p21 = scmp.ge.s32.totalorder %s20, 6
      %s27 = sphi 0, %s39
      %s28 = sphi 0, %s35
      %s29 = sphi 0, %s27
      %s30 = sphi 0, %s28
      %s31 = sphi 0, %s29
      %s32 = sphi 0, %s30
      %s44 = sphi 0, %s46
      %s47 = sphi 0, %s44
      %s48 = sphi 0, %s47
      %s64 = sphi 0, %s48
      %s70 = sphi 0, %s72
      %s73 = sphi 0, %s70
      %s74 = sphi 0, %s73
      %s90 = sphi 0, %s74
      %s94 = sphi 0, %s94
      %s96 = sphi 0, %s94
      %s97 = sphi 0, %s96
      %s111 = sphi 0, %s97
      %s115 = sphi 0, %s115
      %s117 = sphi 0, %s115
      %s118 = sphi 0, %s117
      %s132 = sphi 0, %s118
      %s138 = sphi 0, %s140
      %s141 = sphi 0, %s138
      %s142 = sphi 0, %s141
      %s158 = sphi 0, %s142
      %s166 = sphi 0, %s168
      %s169 = sphi 0, %s166
      %s170 = sphi 0, %s169
      %s186 = sphi 0, %s170
    $region4: #{tpu_custom_call.1} parent=1 // loop_header_branch
      %23 = sbr.rel (%p21) target = $region8
    $region5: #{tpu_custom_call.1} parent=1 // loop_body
      %s25 = ssub.s32 %s20, 1
      %s26 = ssub.s32 %s20, 2
      %s33 = sadd.s32 1, %s28
      %p34 = scmp.ge.s32.totalorder %s33, 2
      %s35 = scalar_select %p34, 0, %s33
      %s36 = sadd.s32 1, %s27
      %s37 = scalar_select %p34, %s36, %s27
      %p38 = scmp.ge.s32.totalorder %s37, 2
      %s39 = scalar_select %p38, 0, %s37
      %s40 = ssub.s32 %s27, %s39
      %s41 = ssub.s32 %s28, %s35
      %s42 = sor.u32 %s40, %s41
      %p43 = scmp.eq.s32.totalorder %s42, 0
      %s45 = sadd.s32 %s44, 1
      %s46 = scalar_select %p43, %s44, %s45
      %p49 = pneg %p43
      %p50 = scmp.eq.s32.totalorder %s20, 3
      %p51 = por %p49, %p50
      %p52 = scmp.ne.s32.totalorder %s44, %s47
      %p53 = scmp.eq.s32.totalorder %s20, 0
      %p54 = por %p52, %p53
      %p55 = scmp.ne.s32.totalorder %s44, %s47
      %p56 = scmp.eq.s32.totalorder %s25, 3
      %p57 = por %p55, %p56
      %p58 = scmp.ne.s32.totalorder %s47, %s48
      %p59 = scmp.eq.s32.totalorder %s25, 0
      %p60 = por %p58, %p59
      %p61 = scmp.ne.s32.totalorder %s47, %s48
      %p62 = scmp.eq.s32.totalorder %s26, 3
      %p63 = por %p61, %p62
      %p65 = scmp.ne.s32.totalorder %s48, %s64
      %p66 = scmp.eq.s32.totalorder %s26, 0
      %p67 = por %p65, %p66
      %s68 = ssub.s32 %s27, %s39
      %p69 = scmp.eq.s32.totalorder %s68, 0
      %s71 = sadd.s32 %s70, 1
      %s72 = scalar_select %p69, %s70, %s71
      %p75 = pneg %p69
      %p76 = scmp.eq.s32.totalorder %s20, 3
      %p77 = por %p75, %p76
      %p78 = scmp.ne.s32.totalorder %s70, %s73
      %p79 = scmp.eq.s32.totalorder %s20, 0
      %p80 = por %p78, %p79
      %p81 = scmp.ne.s32.totalorder %s70, %s73
      %p82 = scmp.eq.s32.totalorder %s25, 3
      %p83 = por %p81, %p82
      %p84 = scmp.ne.s32.totalorder %s73, %s74
      %p85 = scmp.eq.s32.totalorder %s25, 0
      %p86 = por %p84, %p85
      %p87 = scmp.ne.s32.totalorder %s73, %s74
      %p88 = scmp.eq.s32.totalorder %s26, 3
      %p89 = por %p87, %p88
      %p91 = scmp.ne.s32.totalorder %s74, %s90
      %p92 = scmp.eq.s32.totalorder %s26, 0
      %p93 = por %p91, %p92
      %s95 = sadd.s32 %s94, 1
      %p98 = scmp.eq.s32.totalorder %s20, 3
      %p99 = scmp.ne.s32.totalorder %s94, %s96
      %p100 = scmp.eq.s32.totalorder %s20, 0
      %p101 = por %p99, %p100
      %p102 = scmp.ne.s32.totalorder %s94, %s96
      %p103 = scmp.eq.s32.totalorder %s25, 3
      %p104 = por %p102, %p103
      %p105 = scmp.ne.s32.totalorder %s96, %s97
      %p106 = scmp.eq.s32.totalorder %s25, 0
      %p107 = por %p105, %p106
      %p108 = scmp.ne.s32.totalorder %s96, %s97
      %p109 = scmp.eq.s32.totalorder %s26, 3
      %p110 = por %p108, %p109
      %p112 = scmp.ne.s32.totalorder %s97, %s111
      %p113 = scmp.eq.s32.totalorder %s26, 0
      %p114 = por %p112, %p113
      %s116 = sadd.s32 %s115, 1
      %p119 = scmp.eq.s32.totalorder %s20, 3
      %p120 = scmp.ne.s32.totalorder %s115, %s117
      %p121 = scmp.eq.s32.totalorder %s20, 0
      %p122 = por %p120, %p121
      %p123 = scmp.ne.s32.totalorder %s115, %s117
      %p124 = scmp.eq.s32.totalorder %s25, 3
      %p125 = por %p123, %p124
      %p126 = scmp.ne.s32.totalorder %s117, %s118
      %p127 = scmp.eq.s32.totalorder %s25, 0
      %p128 = por %p126, %p127
      %p129 = scmp.ne.s32.totalorder %s117, %s118
      %p130 = scmp.eq.s32.totalorder %s26, 3
      %p131 = por %p129, %p130
      %p133 = scmp.ne.s32.totalorder %s118, %s132
      %p134 = scmp.eq.s32.totalorder %s26, 0
      %p135 = por %p133, %p134
      %s136 = ssub.s32 %s27, %s39
      %p137 = scmp.eq.s32.totalorder %s136, 0
      %s139 = sadd.s32 %s138, 1
      %s140 = scalar_select %p137, %s138, %s139
      %p143 = pneg %p137
      %p144 = scmp.eq.s32.totalorder %s20, 3
      %p145 = por %p143, %p144
      %p146 = scmp.ne.s32.totalorder %s138, %s141
      %p147 = scmp.eq.s32.totalorder %s20, 0
      %p148 = por %p146, %p147
      %p149 = scmp.ne.s32.totalorder %s138, %s141
      %p150 = scmp.eq.s32.totalorder %s25, 3
      %p151 = por %p149, %p150
      %p152 = scmp.ne.s32.totalorder %s141, %s142
      %p153 = scmp.eq.s32.totalorder %s25, 0
      %p154 = por %p152, %p153
      %p155 = scmp.ne.s32.totalorder %s141, %s142
      %p156 = scmp.eq.s32.totalorder %s26, 3
      %p157 = por %p155, %p156
      %p159 = scmp.ne.s32.totalorder %s142, %s158
      %p160 = scmp.eq.s32.totalorder %s26, 0
      %p161 = por %p159, %p160
      %s162 = ssub.s32 %s27, %s39
      %s163 = ssub.s32 %s28, %s35
      %s164 = sor.u32 %s162, %s163
      %p165 = scmp.eq.s32.totalorder %s164, 0
      %s167 = sadd.s32 %s166, 1
      %s168 = scalar_select %p165, %s166, %s167
      %p171 = pneg %p165
      %p172 = scmp.eq.s32.totalorder %s20, 3
      %p173 = por %p171, %p172
      %p174 = scmp.ne.s32.totalorder %s166, %s169
      %p175 = scmp.eq.s32.totalorder %s20, 0
      %p176 = por %p174, %p175
      %p177 = scmp.ne.s32.totalorder %s166, %s169
      %p178 = scmp.eq.s32.totalorder %s25, 3
      %p179 = por %p177, %p178
      %p180 = scmp.ne.s32.totalorder %s169, %s170
      %p181 = scmp.eq.s32.totalorder %s25, 0
      %p182 = por %p180, %p181
      %p183 = scmp.ne.s32.totalorder %s169, %s170
      %p184 = scmp.eq.s32.totalorder %s26, 3
      %p185 = por %p183, %p184
      %p187 = scmp.ne.s32.totalorder %s170, %s186
      %p188 = scmp.eq.s32.totalorder %s26, 0
      %p189 = por %p187, %p188
      %p190 = scmp.le.s32.totalorder 1, %s20
      %p191 = scmp.lt.s32.totalorder %s20, 5
      %p192 = pnand %p190, %p191
      %p193 = pneg %p192
      // Predicated region
      $region9: #{tpu_custom_call.1} parent=5 // pred_check
        _
      $region10: #{tpu_custom_call.1} parent=5 // pred_check_branch
        %195 = sbr.rel (%p192) target = $region12
      $region11: #{tpu_custom_call.1} parent=5 // pred_region
        %s196 = ssub.s32 %s20, 1
        // Predicated region
        $region13: #{tpu_custom_call.1} parent=11 // pred_check
          %p197 = pneg %p107
        $region14: #{tpu_custom_call.1} parent=11 // pred_check_branch
          %199 = sbr.rel (%p197) target = $region16
        $region15: #{tpu_custom_call.1} parent=11 // pred_region
          %201 = vsyncadd [#allocation7], 0
          %s202 = sshll.u32 %s2, 4
          %s203 = int_to_ptr.hbm [resolvable:$true] %s202
          %s204 = sshll.u32 [#allocation8], 4
          %s205 = int_to_ptr.vmem [resolvable:$true] %s204
          %210 = dma.hbm_to_vmem [thread:$0]  %s203, 2048, %s205, [#allocation7], 128, 128, 8
        $region16: #{tpu_custom_call.1} parent=11 // pred_fallthru
          _
        // Predicated region
        $region17: #{tpu_custom_call.1} parent=11 // pred_check
          %p211 = pneg %p128
        $region18: #{tpu_custom_call.1} parent=11 // pred_check_branch
          %213 = sbr.rel (%p211) target = $region20
        $region19: #{tpu_custom_call.1} parent=11 // pred_region
          _
        $region20: #{tpu_custom_call.1} parent=11 // pred_fallthru
          _
      $region12: #{tpu_custom_call.1} parent=5 // pred_fallthru
        _
      %p214 = scmp.lt.s32.totalorder %s20, 4
      // Predicated region
      $region21: #{tpu_custom_call.1} parent=5 // pred_check
        %p215 = pneg %p214
      $region22: #{tpu_custom_call.1} parent=5 // pred_check_branch
        %217 = sbr.rel (%p215) target = $region24
      $region23: #{tpu_custom_call.1} parent=5 // pred_region
        // Predicated region
        $region25: #{tpu_custom_call.1} parent=23 // pred_check
          %p218 = pneg %p54
        $region26: #{tpu_custom_call.1} parent=23 // pred_check_branch
          %220 = sbr.rel (%p218) target = $region28
        $region27: #{tpu_custom_call.1} parent=23 // pred_region
          %s221 = sand.u32 %s44, 1
          %s222 = scalar_lea.sflag [#allocation4], %s221
          %s223 = sand.u32 %s44, 1
          %s224 = smul.addr %s223, 8
          %s225 = scalar_lea.vmem [#allocation3], %s224
          %227 = vsyncadd %s222, 0
          %s228 = smul.addr %s27, 2
          %s229 = sadd.s32 %s28, %s228
          %s230 = smul.addr %s229, 8
          %s231 = scalar_lea.hbm %s0, %s230
          %s233 = sshll.u32 %s231, 4
          %s234 = int_to_ptr.hbm [resolvable:$true] %s233
          %s235 = sshll.u32 %s225, 4
          %s236 = int_to_ptr.vmem [resolvable:$true] %s235
          %238 = dma.hbm_to_vmem [thread:$0]  %s234, 128, %s236, %s222
        $region28: #{tpu_custom_call.1} parent=23 // pred_fallthru
          _
        // Predicated region
        $region29: #{tpu_custom_call.1} parent=23 // pred_check
          %p239 = pneg %p80
        $region30: #{tpu_custom_call.1} parent=23 // pred_check_branch
          %241 = sbr.rel (%p239) target = $region32
        $region31: #{tpu_custom_call.1} parent=23 // pred_region
          %s242 = sand.u32 %s20, 1
          %s243 = scalar_lea.sflag [#allocation7], %s242
          %s244 = sand.u32 %s70, 1
          %s245 = smul.addr %s244, 32
          %s246 = scalar_lea.vmem [#allocation6], %s245
          %248 = vsyncadd %s243, 0
          %s249 = smul.addr %s27, 4
          %s250 = smul.addr %s249, 8
          %s251 = scalar_lea.hbm %s1, %s250
          %s252 = sshll.u32 %s251, 4
          %s253 = int_to_ptr.hbm [resolvable:$true] %s252
          %s254 = sshll.u32 %s246, 4
          %s255 = int_to_ptr.vmem [resolvable:$true] %s254
          %260 = dma.hbm_to_vmem [thread:$0]  %s253, 512, %s255, %s243, 128, 128, 8
        $region32: #{tpu_custom_call.1} parent=23 // pred_fallthru
          _
        // Predicated region
        $region33: #{tpu_custom_call.1} parent=23 // pred_check
          %p261 = pneg %p148
        $region34: #{tpu_custom_call.1} parent=23 // pred_check_branch
          %263 = sbr.rel (%p261) target = $region36
        $region35: #{tpu_custom_call.1} parent=23 // pred_region
          %p264 = scmp.lt.s32.totalorder %s27, 1
          %s265 = scalar_select %p264, %s27, 1
          %s266 = scalar_lea.vmem %s4, %s265
        $region36: #{tpu_custom_call.1} parent=23 // pred_fallthru
          _
      $region24: #{tpu_custom_call.1} parent=5 // pred_fallthru
        _
      %p267 = scmp.le.s32.totalorder 1, %s20
      %p268 = scmp.lt.s32.totalorder %s20, 5
      %p269 = pnand %p267, %p268
      %p270 = pneg %p269
      // Predicated region
      $region37: #{tpu_custom_call.1} parent=5 // pred_check
        _
      $region38: #{tpu_custom_call.1} parent=5 // pred_check_branch
        %272 = sbr.rel (%p269) target = $region40
      $region39: #{tpu_custom_call.1} parent=5 // pred_region
        %s273 = ssub.s32 %s20, 1
        %s274 = sand.u32 %s47, 1
        %s275 = scalar_lea.sflag [#allocation4], %s274
        %s276 = sand.u32 %s47, 1
        %s277 = smul.addr %s276, 8
        %s278 = scalar_lea.vmem [#allocation3], %s277
        // Predicated region
        $region41: #{tpu_custom_call.1} parent=39 // pred_check
          %p279 = pneg %p60
        $region42: #{tpu_custom_call.1} parent=39 // pred_check_branch
          %281 = sbr.rel (%p279) target = $region44
        $region43: #{tpu_custom_call.1} parent=39 // pred_region
          %283 = dma.done %s275, 128
        $region44: #{tpu_custom_call.1} parent=39 // pred_fallthru
          _
        %s284 = sand.u32 %s25, 1
        %s285 = scalar_lea.sflag [#allocation7], %s284
        %s286 = sand.u32 %s73, 1
        %s287 = smul.addr %s286, 32
        %s288 = scalar_lea.vmem [#allocation6], %s287
        // Predicated region
        $region45: #{tpu_custom_call.1} parent=39 // pred_check
          %p289 = pneg %p86
        $region46: #{tpu_custom_call.1} parent=39 // pred_check_branch
          %291 = sbr.rel (%p289) target = $region48
        $region47: #{tpu_custom_call.1} parent=39 // pred_region
          %293 = dma.done %s285, 512
        $region48: #{tpu_custom_call.1} parent=39 // pred_fallthru
          _
        // Predicated region
        $region49: #{tpu_custom_call.1} parent=39 // pred_check
          %p294 = pneg %p107
        $region50: #{tpu_custom_call.1} parent=39 // pred_check_branch
          %296 = sbr.rel (%p294) target = $region52
        $region51: #{tpu_custom_call.1} parent=39 // pred_region
          %298 = dma.done [#allocation7], 2048
        $region52: #{tpu_custom_call.1} parent=39 // pred_fallthru
          _
        %s299 = sand.u32 %s47, 1
        %s300 = scalar_lea.sflag [#allocation4], %s299
        %s301 = sand.u32 %s47, 1
        %s302 = smul.addr %s301, 8
        %s303 = scalar_lea.vmem [#allocation3], %s302
        %p304 = pneg %p60
        %p305 = pneg %p57
        %s306 = sand.u32 %s25, 1
        %s307 = scalar_lea.sflag [#allocation7], %s306
        %s308 = sand.u32 %s73, 1
        %s309 = smul.addr %s308, 32
        %s310 = scalar_lea.vmem [#allocation6], %s309
        %p311 = pneg %p86
        %p312 = pneg %p83
        %p313 = pneg %p107
        %p314 = pneg %p104
        %p315 = pneg %p128
        %p316 = pneg %p125
        %p317 = scmp.lt.s32.totalorder %s29, 1
        %s318 = scalar_select %p317, %s29, 1
        %s319 = scalar_lea.vmem %s4, %s318
        %p320 = pneg %p154
        %p321 = pneg %p151
        %p322 = pneg %p182
        %p323 = pneg %p179
        %s324 = sand.u32 %s169, 1
        %s325 = scalar_lea.sflag [#allocation5], %s324
        %s326 = sand.u32 %s169, 1
        %s327 = smul.addr %s326, 8
        %s328 = scalar_lea.vmem [#allocation9], %s327
        %p329 = scmp.lt.s32.totalorder %s29, 1
        %s330 = scalar_select %p329, %s29, 1
        %s331 = scalar_lea.vmem %s4, %s330
        %p332 = scmp.eq.s32.totalorder %s30, 0
        // Predicated region
        $region53: #{tpu_custom_call.1} parent=39 // pred_check
          %p333 = pneg %p332
        $region54: #{tpu_custom_call.1} parent=39 // pred_check_branch
          %335 = sbr.rel (%p333) target = $region56
        $region55: #{tpu_custom_call.1} parent=39 // pred_region
          %v336 = vld [vmem:[%s288] sm:$0xff]
          %v337 = vld [vmem:[%s288 + $0x8] sm:$0xff]
          %v338 = vld [vmem:[%s288 + $0x10] sm:$0xff]
          %v339 = vld [vmem:[%s288 + $0x18] sm:$0xff]
          %v340 = vld [vmem:[#allocation8] sm:$0xff]
          %v341 = vld [vmem:[#allocation8 + $0x8] sm:$0xff]
          %v342 = vld [vmem:[#allocation8 + $0x10] sm:$0xff]
          %v343 = vld [vmem:[#allocation8 + $0x18] sm:$0xff]
          %v344 = vld [vmem:[#allocation8 + $0x20] sm:$0xff]
          %v345 = vld [vmem:[#allocation8 + $0x28] sm:$0xff]
          %v346 = vld [vmem:[#allocation8 + $0x30] sm:$0xff]
          %v347 = vld [vmem:[#allocation8 + $0x38] sm:$0xff]
          %v348 = vld [vmem:[#allocation8 + $0x40] sm:$0xff]
          %v349 = vld [vmem:[#allocation8 + $0x48] sm:$0xff]
          %v350 = vld [vmem:[#allocation8 + $0x50] sm:$0xff]
          %v351 = vld [vmem:[#allocation8 + $0x58] sm:$0xff]
          %v352 = vld [vmem:[#allocation8 + $0x60] sm:$0xff]
          %v353 = vld [vmem:[#allocation8 + $0x68] sm:$0xff]
          %v354 = vld [vmem:[#allocation8 + $0x70] sm:$0xff]
          %v355 = vld [vmem:[#allocation8 + $0x78] sm:$0xff]
          %v356 = vld [vmem:[%s3] sm:$0x1]
          %v358 = vperm.slane %v356, 0
          %360 = vmatpush.msra.mxu0 %v355
          %361 = vmatpush.msra.mxu0 %v354
          %362 = vmatpush.msra.mxu0 %v353
          %363 = vmatpush.msra.mxu0 %v352
          %364 = vmatpush.msra.mxu0 %v351
          %365 = vmatpush.msra.mxu0 %v350
          %366 = vmatpush.msra.mxu0 %v349
          %367 = vmatpush.msra.mxu0 %v348
          %368 = vmatpush.msra.mxu0 %v347
          %369 = vmatpush.msra.mxu0 %v346
          %370 = vmatpush.msra.mxu0 %v345
          %371 = vmatpush.msra.mxu0 %v344
          %372 = vmatpush.msra.mxu0 %v343
          %373 = vmatpush.msra.mxu0 %v342
          %374 = vmatpush.msra.mxu0 %v341
          %375 = vmatpush.msra.mxu0 %v340
          %376 = vmatmul.f32.gmra.mxu0 %v336
          %v377 = vpop.f32.mrf.mxu0
          %v378 = vadd.f32 %v358, %v377
          %379 = vmatmul.f32.gmra.mxu0 %v337
          %v380 = vpop.f32.mrf.mxu0
          %v381 = vadd.f32 %v358, %v380
          %382 = vmatmul.f32.gmra.mxu0 %v338
          %v383 = vpop.f32.mrf.mxu0
          %v384 = vadd.f32 %v358, %v383
          %385 = vmatmul.f32.gmra.mxu0 %v339
          %v386 = vpop.f32.mrf.mxu0
          %v387 = vadd.f32 %v358, %v386
          %388 = vdwg.mxu0
          %v389 = vmax.f32 %v378, 0.0
          %v390 = vmax.f32 %v381, 0.0
          %v391 = vmax.f32 %v384, 0.0
          %v392 = vmax.f32 %v387, 0.0
          %393 = vst [vmem:[#allocation2] sm:$0xff] %v389
          %394 = vst [vmem:[#allocation2 + $0x8] sm:$0xff] %v390
          %395 = vst [vmem:[#allocation2 + $0x10] sm:$0xff] %v391
          %396 = vst [vmem:[#allocation2 + $0x18] sm:$0xff] %v392
        $region56: #{tpu_custom_call.1} parent=39 // pred_fallthru
          _
        %v397 = vld [vmem:[%s278] sm:$0xff]
        %v398 = vld [vmem:[#allocation8] sm:$0xff]
        %v399 = vld [vmem:[#allocation8 + $0x8] sm:$0xff]
        %v400 = vld [vmem:[#allocation8 + $0x10] sm:$0xff]
        %v401 = vld [vmem:[#allocation8 + $0x18] sm:$0xff]
        %v402 = vld [vmem:[#allocation8 + $0x20] sm:$0xff]
        %v403 = vld [vmem:[#allocation8 + $0x28] sm:$0xff]
        %v404 = vld [vmem:[#allocation8 + $0x30] sm:$0xff]
        %v405 = vld [vmem:[#allocation8 + $0x38] sm:$0xff]
        %v406 = vld [vmem:[#allocation8 + $0x40] sm:$0xff]
        %v407 = vld [vmem:[#allocation8 + $0x48] sm:$0xff]
        %v408 = vld [vmem:[#allocation8 + $0x50] sm:$0xff]
        %v409 = vld [vmem:[#allocation8 + $0x58] sm:$0xff]
        %v410 = vld [vmem:[#allocation8 + $0x60] sm:$0xff]
        %v411 = vld [vmem:[#allocation8 + $0x68] sm:$0xff]
        %v412 = vld [vmem:[#allocation8 + $0x70] sm:$0xff]
        %v413 = vld [vmem:[#allocation8 + $0x78] sm:$0xff]
        %v414 = vld [vmem:[%s3] sm:$0x1]
        %v416 = vperm.slane %v414, 0
        %418 = vmatpush.msra.mxu0 %v413
        %419 = vmatpush.msra.mxu0 %v412
        %420 = vmatpush.msra.mxu0 %v411
        %421 = vmatpush.msra.mxu0 %v410
        %422 = vmatpush.msra.mxu0 %v409
        %423 = vmatpush.msra.mxu0 %v408
        %424 = vmatpush.msra.mxu0 %v407
        %425 = vmatpush.msra.mxu0 %v406
        %426 = vmatpush.msra.mxu0 %v405
        %427 = vmatpush.msra.mxu0 %v404
        %428 = vmatpush.msra.mxu0 %v403
        %429 = vmatpush.msra.mxu0 %v402
        %430 = vmatpush.msra.mxu0 %v401
        %431 = vmatpush.msra.mxu0 %v400
        %432 = vmatpush.msra.mxu0 %v399
        %433 = vmatpush.msra.mxu0 %v398
        %434 = vmatmul.f32.gmra.mxu0 %v397
        %v435 = vpop.f32.mrf.mxu0
        %v436 = vadd.f32 %v416, %v435
        %437 = vdwg.mxu0
        %v438 = vmax.f32 %v436, 0.0
        %v439 = vld [vmem:[#allocation2] sm:$0xff]
        %v440 = vld [vmem:[#allocation2 + $0x8] sm:$0xff]
        %v441 = vld [vmem:[#allocation2 + $0x10] sm:$0xff]
        %v442 = vld [vmem:[#allocation2 + $0x18] sm:$0xff]
        %v443 = vld [vmem:[%s331] sm:$0x1]
        %v445 = vperm.slane %v443, 0
        %447 = vmatpush.xpose.msra.mxu0 0.0
        %448 = vmatpush.xpose.msra.mxu0 0.0
        %449 = vmatpush.xpose.msra.mxu0 0.0
        %450 = vmatpush.xpose.msra.mxu0 0.0
        %451 = vmatpush.xpose.msra.mxu0 0.0
        %452 = vmatpush.xpose.msra.mxu0 0.0
        %453 = vmatpush.xpose.msra.mxu0 0.0
        %454 = vmatpush.xpose.msra.mxu0 0.0
        %455 = vmatpush.xpose.msra.mxu0 0.0
        %456 = vmatpush.xpose.msra.mxu0 0.0
        %457 = vmatpush.xpose.msra.mxu0 0.0
        %458 = vmatpush.xpose.msra.mxu0 0.0
        %459 = vmatpush.xpose.msra.mxu0 %v442
        %460 = vmatpush.xpose.msra.mxu0 %v441
        %461 = vmatpush.xpose.msra.mxu0 %v440
        %462 = vmatpush.xpose.msra.mxu0 %v439
        %463 = vmatmul.f32.gmra.mxu0 %v438
        %v464 = vpop.f32.mrf.mxu0
        %v465 = vadd.f32 %v445, %v464
        %466 = vdwg.mxu0
        %vm467 = vcmask 261120
        %v468 = vsel %vm467, %v465, -inf
        %469 = vmax.xlane.f32.xlu0 %v468
        %v470 = vpop.xlane.xlu0 %469
        %v471 = vsub.f32 %v465, %v470
        %v472 = vmul.f32 %v471, 1.442695
        %v473 = vpow.pop %v472
        %v474 = vsel %vm467, %v473, 0.0
        %475 = vadd.xlane.f32.xlu0 %v474
        %v476 = vpop.xlane.xlu0 %475
        %v477 = vrcp.pop %v476
        %v478 = vmul.f32 %v476, %v477
        %v479 = vsub.f32 1.0, %v478
        %v480 = vmul.f32 %v477, %v479
        %v481 = vadd.f32 %v477, %v480
        %vm482 = vweird.f32 %v476
        %vm483 = vweird.f32 %v477
        %vm484 = vmor %vm482, %vm483
        %v485 = vsel %vm484, %v477, %v481
        %v486 = vand.u32 2147483647, %v476
        %vm487 = vcmp.eq.f32.partialorder %v486, 8.507059e+37
        %v488 = vand.u32 %v476, 2147483648
        %v489 = vor.u32 1.1754944e-38, %v488
        %v490 = vsel %vm487, %v489, %v485
        %v491 = vmul.f32 %v473, %v490
        %v492 = vld [vmem:[%s288] sm:$0xff]
        %v493 = vld [vmem:[%s288 + $0x8] sm:$0xff]
        %v494 = vld [vmem:[%s288 + $0x10] sm:$0xff]
        %v495 = vld [vmem:[%s288 + $0x18] sm:$0xff]
        %v497 = vsel %vm467, %v491, 0
        %499 = vmatpush.msra.mxu0 0.0
        %500 = vmatpush.msra.mxu0 0.0
        %501 = vmatpush.msra.mxu0 0.0
        %502 = vmatpush.msra.mxu0 0.0
        %503 = vmatpush.msra.mxu0 0.0
        %504 = vmatpush.msra.mxu0 0.0
        %505 = vmatpush.msra.mxu0 0.0
        %506 = vmatpush.msra.mxu0 0.0
        %507 = vmatpush.msra.mxu0 0.0
        %508 = vmatpush.msra.mxu0 0.0
        %509 = vmatpush.msra.mxu0 0.0
        %510 = vmatpush.msra.mxu0 0.0
        %511 = vmatpush.msra.mxu0 %v495
        %512 = vmatpush.msra.mxu0 %v494
        %513 = vmatpush.msra.mxu0 %v493
        %514 = vmatpush.msra.mxu0 %v492
        %515 = vmatmul.f32.gmra.mxu0 %v497
        %v516 = vpop.f32.mrf.mxu0
        %v517 = vadd.f32 0.0, %v516
        %518 = vdwg.mxu0
        %519 = vst [vmem:[%s328] sm:$0xff] %v517
        %s520 = sand.u32 %s169, 1
        %s521 = scalar_lea.sflag [#allocation5], %s520
        %s522 = sand.u32 %s169, 1
        %s523 = smul.addr %s522, 8
        %s524 = scalar_lea.vmem [#allocation9], %s523
        // Predicated region
        $region57: #{tpu_custom_call.1} parent=39 // pred_check
          %p525 = pneg %p179
        $region58: #{tpu_custom_call.1} parent=39 // pred_check_branch
          %527 = sbr.rel (%p525) target = $region60
        $region59: #{tpu_custom_call.1} parent=39 // pred_region
          %529 = vsyncadd %s521, 0
          %s530 = smul.addr %s29, 2
          %s531 = sadd.s32 %s30, %s530
          %s532 = smul.addr %s531, 8
          %s533 = scalar_lea.hbm %s5, %s532
          %s535 = sshll.u32 %s524, 4
          %s536 = int_to_ptr.vmem [resolvable:$true] %s535
          %s537 = sshll.u32 %s533, 4
          %s538 = int_to_ptr.hbm [resolvable:$true] %s537
          %540 = dma.vmem_to_hbm [thread:$0]  %s536, 128, %s538, %s521
        $region60: #{tpu_custom_call.1} parent=39 // pred_fallthru
          _
      $region40: #{tpu_custom_call.1} parent=5 // pred_fallthru
        _
      %p541 = scmp.le.s32.totalorder 2, %s20
      // Predicated region
      $region61: #{tpu_custom_call.1} parent=5 // pred_check
        %p542 = pneg %p541
      $region62: #{tpu_custom_call.1} parent=5 // pred_check_branch
        %544 = sbr.rel (%p542) target = $region64
      $region63: #{tpu_custom_call.1} parent=5 // pred_region
        %s545 = ssub.s32 %s20, 2
        // Predicated region
        $region65: #{tpu_custom_call.1} parent=63 // pred_check
          %p546 = pneg %p185
        $region66: #{tpu_custom_call.1} parent=63 // pred_check_branch
          %548 = sbr.rel (%p546) target = $region68
        $region67: #{tpu_custom_call.1} parent=63 // pred_region
          %s549 = sand.u32 %s170, 1
          %s550 = scalar_lea.sflag [#allocation5], %s549
          %s551 = sand.u32 %s170, 1
          %s552 = smul.addr %s551, 8
          %s553 = scalar_lea.vmem [#allocation9], %s552
          %555 = dma.done %s550, 128
        $region68: #{tpu_custom_call.1} parent=63 // pred_fallthru
          _
      $region64: #{tpu_custom_call.1} parent=5 // pred_fallthru
        _
    $region6: #{tpu_custom_call.1} parent=1 // loop_footer
      %s24 = sadd.s32 1, %s20
    $region7: #{tpu_custom_call.1} parent=1 // loop_footer_branch
      %19 = sbr.rel target = $region3
    $region8: #{tpu_custom_call.1} parent=1 // loop_exit
      _
    %556 = vsyncpa [#allocation4], 1
    %s557 = scalar_lea.sflag [#allocation4], 1
    %558 = vsyncpa %s557, 1
    %559 = vsyncpa [#allocation7], 1
    %s560 = scalar_lea.sflag [#allocation7], 1
    %561 = vsyncpa %s560, 1
    %562 = vsyncpa [#allocation5], 1
    %s563 = scalar_lea.sflag [#allocation5], 1
    %564 = vsyncpa %s563, 1

</llo_original>
